<compile_context>
chip_gen: v5e
topology: v5e:2x2
jax: 0.10.0
libtpu: 0.0.40
codegen_flags: <defaults>
</compile_context>

<pallas_src>
import functools
import inspect

import jax
import jax.numpy as jnp
from jax.experimental import pallas as pl
from jax.experimental.pallas import tpu as pltpu


def _round_up(a, m):
    return -(-a // m) * m


def _global_max_kernel(x_ref, o_ref, *, hw, hw_tile, need_mask, neg_value):
    """x_ref: (rows_tile, hw_tile) VMEM block; o_ref: (rows_tile, 1) resident accumulator."""
    j = pl.program_id(1)  # hw (reduction) axis, last grid axis

    def accumulate(block_max):
        @pl.when(j == 0)
        def _():
            o_ref[...] = block_max

        @pl.when(j > 0)
        def _():
            o_ref[...] = jnp.maximum(o_ref[...], block_max)

    def reduce_block(mask_lanes):
        x = x_ref[...]
        if mask_lanes:
            # Only the ragged final hw block can read lanes past hw -> mask them
            # with the identity of max.
            lane = jax.lax.broadcasted_iota(jnp.int32, x.shape, 1)
            valid = (j * hw_tile + lane) < hw
            x = jnp.where(valid, x, jnp.asarray(neg_value, x.dtype))
        accumulate(jnp.max(x, axis=-1, keepdims=True))

    if need_mask:
        last = pl.num_programs(1) - 1

        @pl.when(j == last)
        def _():
            reduce_block(mask_lanes=True)   # masked path only on the last block

        @pl.when(j < last)
        def _():
            reduce_block(mask_lanes=False)  # unmasked fast path for earlier blocks
    else:
        reduce_block(mask_lanes=False)


def _choose_tiles(rows, hw, itemsize, target_block_bytes, max_row_bytes):
    """Pick (rows_tile, hw_tile) so one input block is ~target_block_bytes."""
    sub = max(8, 32 // itemsize)   # sublane multiple: 8 (f32), 16 (bf16), 32 (int8/fp8)
    lane = 128

    if hw * itemsize <= max_row_bytes:
        hw_tile = hw               # whole row in one block: single reduction step
    else:
        hw_tile = max(lane, (max_row_bytes // itemsize) // lane * lane)

    padded_hw = max(_round_up(hw_tile, lane), lane)  # lane padding in VMEM
    rows_tile = target_block_bytes // (padded_hw * itemsize)
    rows_tile = max(sub, (rows_tile // sub) * sub)

    if rows <= sub:
        rows_tile = rows  # full dim: (8,128) divisibility constraint waived
    else:
        # Guarantee >= 2 balanced row blocks so both TensorCores get work on v7x
        # megacore ("parallel" axis shards across cores). Harmless on v5e/v6e.
        half_rows = _round_up((rows + 1) // 2, sub)
        rows_tile = min(rows_tile, half_rows)
    return rows_tile, hw_tile, sub, lane


def _supports_buffered_pipeline():
    try:
        return hasattr(pl, "Buffered") and (
            "pipeline_mode" in inspect.signature(pl.BlockSpec).parameters)
    except (TypeError, ValueError):
        return False


def global_max_pool2d(x, *, _target_block_bytes=4 * 1024 * 1024,
                      _max_row_bytes=128 * 1024):
    """Equivalent of F.max_pool2d(x, kernel_size=x.shape[2:]) for NCHW input."""
    N, C, H, W = x.shape
    rows = N * C
    hw = H * W
    x2d = x.reshape(rows, hw)

    itemsize = jnp.dtype(x.dtype).itemsize
    rows_tile, hw_tile, sub, lane = _choose_tiles(
        rows, hw, itemsize, _target_block_bytes, _max_row_bytes)

    grid = (pl.cdiv(rows, rows_tile), pl.cdiv(hw, hw_tile))
    need_mask = (grid[1] > 1) and (hw % hw_tile != 0)

    # Identity element of max for the padded lanes of a ragged final hw block.
    if jnp.issubdtype(x.dtype, jnp.floating):
        if itemsize == 1:
            # float8 variants (e.g. e4m3fn) have no inf encoding; use finite min.
            neg_value = float(jnp.finfo(x.dtype).min)
        else:
            neg_value = -jnp.inf
    else:
        neg_value = int(jnp.iinfo(x.dtype).min)

    kernel = functools.partial(
        _global_max_kernel,
        hw=hw, hw_tile=hw_tile, need_mask=need_mask, neg_value=neg_value,
    )

    # 3-deep input buffering on the hw-tiled path: per-step compute is ~0, so an
    # extra buffer keeps the next DMA queued across the step boundary.
    triple_buffer = (grid[1] > 1) and _supports_buffered_pipeline()
    index_map = lambda i, j: (i, j)
    if triple_buffer:
        in_spec = pl.BlockSpec((rows_tile, hw_tile), index_map,
                               pipeline_mode=pl.Buffered(3))
    else:
        in_spec = pl.BlockSpec((rows_tile, hw_tile), index_map)

    # Explicit VMEM budget: N input buffers + double-buffered (lane-padded) output
    # accumulator + slack. Fits every generation (v7x 64 MiB/TC, v5e/v6e 128 MiB)
    # and overrides v5e's 16 MiB default scoped-VMEM limit.
    in_block_bytes = _round_up(rows_tile, sub) * _round_up(hw_tile, lane) * itemsize
    out_block_bytes = _round_up(rows_tile, sub) * lane * itemsize
    n_in_bufs = 3 if triple_buffer else 2
    vmem_limit = n_in_bufs * in_block_bytes + 2 * out_block_bytes + (2 << 20)
    vmem_limit = int(min(max(vmem_limit, 4 << 20), 56 << 20))

    out2d = pl.pallas_call(
        kernel,
        out_shape=jax.ShapeDtypeStruct((rows, 1), x.dtype),
        grid_spec=pltpu.PrefetchScalarGridSpec(
            num_scalar_prefetch=0,
            grid=grid,
            in_specs=[in_spec],
            # Same output block across the hw axis -> resident running-max accumulator.
            out_specs=pl.BlockSpec((rows_tile, 1), lambda i, j: (i, 0)),
        ),
        compiler_params=pltpu.CompilerParams(
            dimension_semantics=("parallel", "arbitrary"),
            vmem_limit_bytes=vmem_limit,
        ),
        cost_estimate=pl.CostEstimate(
            flops=rows * hw,
            transcendentals=0,
            bytes_accessed=rows * hw * itemsize + rows * itemsize,
        ),
    )(x2d)

    # TODO(synk): small-hw (<128) lane-packing path (reshape to (rows/K, K*hw),
    # K=floor(128/hw), segmented max) deferred pending an HBM-BW measurement.
    return out2d.reshape(N, C, 1, 1)


if __name__ == "__main__":
    key = jax.random.PRNGKey(0)
    ok = True

    # Primary case (matches the module spec): small NCHW input, single hw block.
    N, C, H, W = 2, 4, 16, 16
    x = jax.random.normal(key, (N, C, H, W), dtype=jnp.float32)
    out = global_max_pool2d(x)
    jax.block_until_ready(out)
    ref = jnp.max(x, axis=(2, 3), keepdims=True)
    ok &= out.shape == (N, C, 1, 1)
    ok &= bool(jnp.allclose(out, ref))

    # Tiled-hw reduction path (even split, no masking; triple-buffered if supported).
    out_t = global_max_pool2d(x, _max_row_bytes=512)  # forces hw_tile=128, 2 hw blocks
    jax.block_until_ready(out_t)
    ok &= bool(jnp.allclose(out_t, ref))

    # Masked last hw block (hw=130, not a multiple of 128) + rows not a sublane multiple.
    x2 = jax.random.normal(jax.random.PRNGKey(0), (2, 3, 10, 13), dtype=jnp.float32)
    out2 = global_max_pool2d(x2, _max_row_bytes=512)
    jax.block_until_ready(out2)
    ref2 = jnp.max(x2, axis=(2, 3), keepdims=True)
    ok &= out2.shape == (2, 3, 1, 1)
    ok &= bool(jnp.allclose(out2, ref2))

    assert ok, "mismatch vs reference"
    print("KERNEL_OK")
</pallas_src>

<mosaic_0001>
module attributes {stable_mosaic.version = 11 : i64} {
  func.func @_global_max_kernel(%arg0: i32, %arg1: i32, %arg2: memref<8x256xf32, #tpu.memory_space<vmem>>, %arg3: memref<8x1xf32, #tpu.memory_space<vmem>>) attributes {dimension_semantics = [#tpu.dimension_semantics<parallel>, #tpu.dimension_semantics<arbitrary>], iteration_bounds = array<i64: 1, 1>, scalar_prefetch = 0 : i64, scratch_operands = 0 : i64, tpu.core_type = #tpu.core_type<tc>, window_params = [{transform_indices = @transform_0, window_bounds = array<i64: 8, 256>}, {transform_indices = @transform_1, window_bounds = array<i64: 8, 1>}]} {
    %c0 = arith.constant 0 : index
    %c0_0 = arith.constant 0 : index
    %0 = vector.load %arg2[%c0, %c0_0] : memref<8x256xf32, #tpu.memory_space<vmem>>, vector<8x256xf32>
    %cst = arith.constant dense<0xFF800000> : vector<8xf32>
    %1 = vector.multi_reduction <maximumf>, %0, %cst [1] : vector<8x256xf32> to vector<8xf32>
    %2 = vector.shape_cast %1 : vector<8xf32> to vector<8x1xf32>
    %c0_i32 = arith.constant 0 : i32
    %3 = arith.cmpi eq, %arg1, %c0_i32 : i32
    %4 = arith.extui %3 : i1 to i32
    %c0_i32_1 = arith.constant 0 : i32
    %5 = arith.cmpi ne, %4, %c0_i32_1 : i32
    scf.if %5 {
      %c0_4 = arith.constant 0 : index
      %c0_5 = arith.constant 0 : index
      %9 = vector.load %arg3[%c0_4, %c0_5] : memref<8x1xf32, #tpu.memory_space<vmem>>, vector<8x1xf32>
      tpu.vector_store %arg3[%c0_4, %c0_5], %2 {strides = array<i32>} : memref<8x1xf32, #tpu.memory_space<vmem>>, vector<8x1xf32>,
    } else {
    }
    %c0_i32_2 = arith.constant 0 : i32
    %6 = arith.cmpi sgt, %arg1, %c0_i32_2 : i32
    %7 = arith.extui %6 : i1 to i32
    %c0_i32_3 = arith.constant 0 : i32
    %8 = arith.cmpi ne, %7, %c0_i32_3 : i32
    scf.if %8 {
      %c0_4 = arith.constant 0 : index
      %c0_5 = arith.constant 0 : index
      %9 = vector.load %arg3[%c0_4, %c0_5] : memref<8x1xf32, #tpu.memory_space<vmem>>, vector<8x1xf32>
      %10 = arith.maximumf %9, %2 : vector<8x1xf32>
      %c0_6 = arith.constant 0 : index
      %c0_7 = arith.constant 0 : index
      %11 = vector.load %arg3[%c0_6, %c0_7] : memref<8x1xf32, #tpu.memory_space<vmem>>, vector<8x1xf32>
      tpu.vector_store %arg3[%c0_6, %c0_7], %10 {strides = array<i32>} : memref<8x1xf32, #tpu.memory_space<vmem>>, vector<8x1xf32>,
    } else {
    }
    return
  }
  func.func @transform_0(%arg0: i32, %arg1: i32) -> (i32, i32) {
    %c0_i32 = arith.constant 0 : i32
    return %arg0, %arg1 : i32, i32
  }
  func.func @transform_1(%arg0: i32, %arg1: i32) -> (i32, i32) {
    %c0_i32 = arith.constant 0 : i32
    %c0_i32_0 = arith.constant 0 : i32
    return %arg0, %c0_i32 : i32, i32
  }
}

</mosaic_0001>

<llo_original>
// kernel: tpu_custom_call.1
$region0: #{tpu_custom_call.1}
  #allocation0 [shape = 'u32[]', space=smem, size = 0x4, offset = 0x4, fixed_abs, tag = 'smem constant byte address 0x4 - core index']
  #allocation1 [shape = 'u32[72,128]{1,0:T(1,128)}', space=vmem, size = 0x9000, scoped, tag = 'internal scratch']
  %s0 = inlined_call_operand.hbm [shape: f32[8,256], index: 0, kind: input, shape index: {}]
  %s1 = inlined_call_operand.vmem [shape: f32[8,1], index: 1, kind: output, shape index: {}]
  %s2 = sld [smem:[#allocation0]]
  $region26: #{tpu_custom_call.1} parent=0
    _
  %s4 = ssub.s32 1, %s2
  %s5 = scalar_select 0, %s4, %s2
  $region1: #{tpu_custom_call.1} parent=0
    #allocation2 [shape = 'u8[8192]{0}', space=vmem, size = 0x2000, scoped, tag = 'input window, operand 0, single buffered']
    #allocation3 [shape = 's32[1]{0}', space=sflag, size = 0x4, scoped, tag = 'scoped memory for tpu_custom_call.1']
    %6 = vsyncpa [#allocation3], 0
    // Predicated region
    $region2: #{tpu_custom_call.1} parent=1 // pred_check
      _
    $region3: #{tpu_custom_call.1} parent=1 // pred_check_branch
      %8 = sbr.rel (0) target = $region5
    $region4: #{tpu_custom_call.1} parent=1 // pred_region
      %10 = vsyncadd [#allocation3], 0
      %s12 = sshll.u32 %s0, 4
      %s13 = int_to_ptr.hbm [resolvable:$true] %s12
      %s14 = sshll.u32 [#allocation2], 4
      %s15 = int_to_ptr.vmem [resolvable:$true] %s14
      %17 = dma.hbm_to_vmem [thread:$0]  %s13, 256, %s15, [#allocation3]
    $region5: #{tpu_custom_call.1} parent=1 // pred_fallthru
      _
    // Predicated region
    $region6: #{tpu_custom_call.1} parent=1 // pred_check
      _
    $region7: #{tpu_custom_call.1} parent=1 // pred_check_branch
      %19 = sbr.rel (0) target = $region9
    $region8: #{tpu_custom_call.1} parent=1 // pred_region
      %21 = dma.done [#allocation3], 256
    $region9: #{tpu_custom_call.1} parent=1 // pred_fallthru
      _
    %v22 = vld [vmem:[#allocation2] sm:$0xff]
    %v23 = vld [vmem:[#allocation2 + $0x8] sm:$0xff]
    %v24 = vmax.f32 %v22, %v23
    %25 = vmax.xlane.f32.xlu0 %v24
    %v26 = vpop.xlane.xlu0 %25
    %p27 = scmp.eq.s32.totalorder 0, 0
    // Predicated region
    $region10: #{tpu_custom_call.1} parent=1 // pred_check
      %p28 = pneg %p27
    $region11: #{tpu_custom_call.1} parent=1 // pred_check_branch
      %30 = sbr.rel (%p28) target = $region13
    $region12: #{tpu_custom_call.1} parent=1 // pred_region
      %vm31 = vcmask 7168
      %32 = vst.msk [vmem:[%s1] sm:$0xff] %vm31, %v26
    $region13: #{tpu_custom_call.1} parent=1 // pred_fallthru
      _
    %p33 = scmp.gt.s32.totalorder 0, 0
    // Predicated region
    $region14: #{tpu_custom_call.1} parent=1 // pred_check
      %p34 = pneg %p33
    $region15: #{tpu_custom_call.1} parent=1 // pred_check_branch
      %36 = sbr.rel (%p34) target = $region17
    $region16: #{tpu_custom_call.1} parent=1 // pred_region
      %v37 = vld [vmem:[%s1] sm:$0xff]
      %v38 = vmax.f32 %v37, %v26
      %vm39 = vcmask 7168
      %40 = vst.msk [vmem:[%s1] sm:$0xff] %vm39, %v38
    $region17: #{tpu_custom_call.1} parent=1 // pred_fallthru
      _
    // Predicated region
    $region18: #{tpu_custom_call.1} parent=1 // pred_check
      _
    $region19: #{tpu_custom_call.1} parent=1 // pred_check_branch
      %42 = sbr.rel (0) target = $region21
    $region20: #{tpu_custom_call.1} parent=1 // pred_region
      _
    $region21: #{tpu_custom_call.1} parent=1 // pred_fallthru
      _
    // Predicated region
    $region22: #{tpu_custom_call.1} parent=1 // pred_check
      _
    $region23: #{tpu_custom_call.1} parent=1 // pred_check_branch
      %44 = sbr.rel (0) target = $region25
    $region24: #{tpu_custom_call.1} parent=1 // pred_region
      _
    $region25: #{tpu_custom_call.1} parent=1 // pred_fallthru
      _
    %45 = vsyncpa [#allocation3], 1

</llo_original>
